<compile_context>
chip_gen: v5e
topology: v5e:2x2
jax: 0.10.0
libtpu: 0.0.40
codegen_flags: <defaults>
</compile_context>

<pallas_src>
import functools

import numpy as np
import jax
import jax.numpy as jnp
from jax import lax
from jax.experimental import pallas as pl
from jax.experimental.pallas import tpu as pltpu


def channel_kernel(sig_ref, cof_ref, w2_ref, out_ref, h_ref, *, L, SMK):
    """One row-tile of (batch*path) rows.

    sig_ref : (R, 2*SMK)   fused [signal_real | signal_imag] slab
    cof_ref : (R, 2*L)     fused [cof_real | cof_imag] taps (delay j = col j / L+j)
    w2_ref  : (2*L, 2*M)   block DFT matrix [[Wr, Wi], [-Wi, Wr]]
    out_ref : (R, 2*SMK)   fused [out_real | out_imag]
    h_ref   : (R, 2*M)     fused [H_real   | H_imag]
    """
    R = sig_ref.shape[0]
    HEAD = min(128, SMK)               # only lanes < L-1 (< 128) can ever wrap

    # ---- single load of the fused slab, split at the 128-aligned midpoint ----
    sig = sig_ref[...]
    xr = sig[:, :SMK]
    xi = sig[:, SMK:]
    C = cof_ref[...]                   # (R, 2L)

    lane = lax.broadcasted_iota(jnp.int32, (R, HEAD), 1)   # hoisted once

    # ---- tap j = 0: no shift, no wrapped lanes ----
    tr0 = jnp.broadcast_to(C[:, 0:1], (R, SMK))
    ti0 = jnp.broadcast_to(C[:, L:L + 1], (R, SMK))
    acc_r = xr * tr0 - xi * ti0
    acc_i = xr * ti0 + xi * tr0

    # accumulators split at the 128-lane boundary: head needs the wrap-mask,
    # tail stays completely select-free.
    acc_rh, acc_ih = acc_r[:, :HEAD], acc_i[:, :HEAD]
    if SMK > HEAD:
        acc_rt, acc_it = acc_r[:, HEAD:], acc_i[:, HEAD:]

    # ---- taps j = 1 .. L-1: causal shift via XLU roll, wrapped lanes zeroed ----
    # NOTE: static unroll is fine for small L; for L >= ~32 switch to
    # lax.fori_loop(..., unroll=True) to bound vreg live ranges.
    for j in range(1, L):
        sr = pltpu.roll(xr, shift=j, axis=1)   # sr[:, k] == xr[:, k-j] for k >= j
        si = pltpu.roll(xi, shift=j, axis=1)

        # bind each tap broadcast ONCE and reuse (no implicit CSE of broadcasts)
        trb = jnp.broadcast_to(C[:, j:j + 1], (R, SMK))
        tib = jnp.broadcast_to(C[:, L + j:L + j + 1], (R, SMK))
        trh, tih = trb[:, :HEAD], tib[:, :HEAD]

        # head block: zero the wrapped lanes (k < j)
        hr = jnp.where(lane < j, 0.0, sr[:, :HEAD])
        hi = jnp.where(lane < j, 0.0, si[:, :HEAD])
        acc_rh = acc_rh + hr * trh - hi * tih
        acc_ih = acc_ih + hr * tih + hi * trh

        if SMK > HEAD:
            trt, tit = trb[:, HEAD:], tib[:, HEAD:]
            srt, sit = sr[:, HEAD:], si[:, HEAD:]
            acc_rt = acc_rt + srt * trt - sit * tit
            acc_it = acc_it + srt * tit + sit * trt

    # ---- fused lane-dense output slab (unmasked stores when SMK % 128 == 0) ----
    out_ref[:, :HEAD] = acc_rh
    out_ref[:, SMK:SMK + HEAD] = acc_ih
    if SMK > HEAD:
        out_ref[:, HEAD:SMK] = acc_rt
        out_ref[:, SMK + HEAD:] = acc_it

    # ---- H_t = FFT_M(zero-padded cof): ONE fused MXU dot, full-f32 precision ----
    h_ref[...] = jnp.dot(C, w2_ref[...],
                         preferred_element_type=jnp.float32,
                         precision=jax.lax.Precision.HIGHEST)


@functools.lru_cache(maxsize=None)
def make_dft_block(L, M):
    """(2L, 2M) block DFT matrix, built once per (L, M) and cached."""
    k = np.arange(L, dtype=np.float64)[:, None]
    m = np.arange(M, dtype=np.float64)[None, :]
    ang = -2.0 * np.pi * k * m / float(M)
    Wr = np.cos(ang)
    Wi = np.sin(ang)
    W2 = np.block([[Wr, Wi], [-Wi, Wr]]).astype(np.float32)
    return jnp.asarray(W2)


def make_power(L, decay):
    p = jnp.exp(-jnp.arange(L, dtype=jnp.float32) / decay).reshape(1, 1, L)
    return p / jnp.sum(p)


def sample_cof(key, N, P, L, power):
    """Equivalent of Channel.sample's cof draw (deterministic via PRNGKey)."""
    # TODO(synk): torch.randn RNG stream is not reproduced; jax.random.normal is
    # used with the identical sqrt(power/2) scaling (same distribution).
    k1, k2 = jax.random.split(key)
    scale = jnp.sqrt(power / 2.0)
    cof_r = scale * jax.random.normal(k1, (N, P, L), jnp.float32)
    cof_i = scale * jax.random.normal(k2, (N, P, L), jnp.float32)
    return cof_r, cof_i


def _round_up(x, m):
    return (x + m - 1) // m * m


def _pick_row_tile(NP, SMK, L, M):
    """VMEM-budgeted, generation-safe row tile that still gives >= 2 grid steps."""
    # per-row bytes: double-buffered in/out pipeline buffers + in-kernel temporaries
    per_row = 4 * (2 * (2 * SMK + 2 * SMK + 2 * L + 2 * M) + 8 * SMK)
    budget = 8 * 1024 * 1024          # fits v5e's 16 MiB scoped default & v7x's 64 MiB VMEM
    tile = max(8, (budget // per_row) // 8 * 8)
    tile = min(tile, 1024)
    # cap so the "parallel" row axis has >= 2 steps (shards across v7x's two TCs)
    tile = min(tile, _round_up(pl.cdiv(NP, 2), 8))
    tile = min(tile, NP)              # never exceed the array (full-dim blocks are legal)
    return tile


def channel_forward(x, cof_r, cof_i, M):
    """x: complex64 (N, P, SMK); cof_r/cof_i: float32 (N, P, L). Returns (output, H_t)."""
    N, P, SMK = x.shape
    L = cof_r.shape[-1]
    NP = N * P
    assert L <= SMK and L <= 128, "kernel assumes tap count <= min(SMK, 128)"
    # (SMK % 128 == 0 gives fully unmasked lane-dense stores; other SMK still correct.)

    # fused lane-dense input slab [real | imag] (mirrors the output layout)
    sig = jnp.concatenate(
        [jnp.real(x).astype(jnp.float32).reshape(NP, SMK),
         jnp.imag(x).astype(jnp.float32).reshape(NP, SMK)], axis=-1)       # (NP, 2*SMK)
    C = jnp.concatenate([cof_r.reshape(NP, L), cof_i.reshape(NP, L)],
                        axis=-1).astype(jnp.float32)                       # (NP, 2L)
    W2 = make_dft_block(L, M)                                              # (2L, 2M)

    row_tile = _pick_row_tile(NP, SMK, L, M)
    grid = (pl.cdiv(NP, row_tile),)

    kernel = functools.partial(channel_kernel, L=L, SMK=SMK)

    out_ri, h_ri = pl.pallas_call(
        kernel,
        out_shape=(
            jax.ShapeDtypeStruct((NP, 2 * SMK), jnp.float32),
            jax.ShapeDtypeStruct((NP, 2 * M), jnp.float32),
        ),
        grid=grid,
        in_specs=[
            pl.BlockSpec((row_tile, 2 * SMK), lambda i: (i, 0)),
            pl.BlockSpec((row_tile, 2 * L), lambda i: (i, 0)),
            pl.BlockSpec((2 * L, 2 * M), lambda i: (0, 0)),
        ],
        out_specs=[
            pl.BlockSpec((row_tile, 2 * SMK), lambda i: (i, 0)),
            pl.BlockSpec((row_tile, 2 * M), lambda i: (i, 0)),
        ],
        compiler_params=pltpu.CompilerParams(
            dimension_semantics=("parallel",)),
    )(sig, C, W2)

    # NOTE: downstream code that can consume the packed [re|im] slabs should skip
    # this wrapper-side complex reassembly (it is one extra HBM pass over both outputs).
    output = (out_ri[:, :SMK] + 1j * out_ri[:, SMK:]).astype(jnp.complex64).reshape(N, P, SMK)
    H_t = (h_ri[:, :M] + 1j * h_ri[:, M:]).astype(jnp.complex64).reshape(N, P, M)
    return output, H_t


if __name__ == "__main__":
    # small opt: L=8 taps, M=64 subcarriers, decay=4, signal length SMK=128
    N, P, SMK, L, M, decay = 2, 4, 128, 8, 64, 4.0

    key = jax.random.PRNGKey(0)
    kx_r, kx_i, kc = jax.random.split(key, 3)
    x = (jax.random.normal(kx_r, (N, P, SMK), jnp.float32)
         + 1j * jax.random.normal(kx_i, (N, P, SMK), jnp.float32)).astype(jnp.complex64)

    power = make_power(L, decay)
    cof_r, cof_i = sample_cof(kc, N, P, L, power)

    output, H_t = channel_forward(x, cof_r, cof_i, M)
    output, H_t = jax.block_until_ready((output, H_t))

    # ---- reference (plain JAX) for a correctness sanity check ----
    cof_c = (cof_r + 1j * cof_i).astype(jnp.complex64)
    out_ref = jnp.zeros_like(x)
    for j in range(L):
        shifted = jnp.pad(x, ((0, 0), (0, 0), (j, 0)))[:, :, :SMK]
        out_ref = out_ref + cof_c[:, :, j:j + 1] * shifted
    cof_zp = jnp.concatenate([cof_c, jnp.zeros((N, P, M - L), jnp.complex64)], axis=-1)
    H_ref = jnp.fft.fft(cof_zp, axis=-1)

    assert output.shape == (N, P, SMK) and output.dtype == jnp.complex64
    assert H_t.shape == (N, P, M) and H_t.dtype == jnp.complex64
    assert jnp.allclose(output, out_ref, atol=1e-4, rtol=1e-4)
    assert jnp.allclose(H_t, H_ref, atol=1e-3, rtol=1e-3)

    print("KERNEL_OK")
</pallas_src>

<mosaic_0001>
module attributes {stable_mosaic.version = 11 : i64} {
  func.func @channel_kernel(%arg0: i32, %arg1: memref<8x256xf32, #tpu.memory_space<vmem>>, %arg2: memref<8x16xf32, #tpu.memory_space<vmem>>, %arg3: memref<16x128xf32, #tpu.memory_space<vmem>>, %arg4: memref<8x256xf32, #tpu.memory_space<vmem>>, %arg5: memref<8x128xf32, #tpu.memory_space<vmem>>) attributes {dimension_semantics = [#tpu.dimension_semantics<parallel>], iteration_bounds = array<i64: 1>, scalar_prefetch = 0 : i64, scratch_operands = 0 : i64, tpu.core_type = #tpu.core_type<tc>, window_params = [{transform_indices = @transform_0, window_bounds = array<i64: 8, 256>}, {transform_indices = @transform_1, window_bounds = array<i64: 8, 16>}, {pipeline_mode = #tpu.pipeline_mode<synchronous>, transform_indices = @transform_2, window_bounds = array<i64: 16, 128>}, {transform_indices = @transform_3, window_bounds = array<i64: 8, 256>}, {transform_indices = @transform_4, window_bounds = array<i64: 8, 128>}]} {
    %c0 = arith.constant 0 : index
    %c0_0 = arith.constant 0 : index
    %0 = vector.load %arg1[%c0, %c0_0] : memref<8x256xf32, #tpu.memory_space<vmem>>, vector<8x256xf32>
    %1 = vector.extract_strided_slice %0 {offsets = [0, 0], sizes = [8, 128], strides = [1, 1]} : vector<8x256xf32> to vector<8x128xf32>
    %2 = vector.extract_strided_slice %0 {offsets = [0, 128], sizes = [8, 128], strides = [1, 1]} : vector<8x256xf32> to vector<8x128xf32>
    %c0_1 = arith.constant 0 : index
    %c0_2 = arith.constant 0 : index
    %3 = vector.load %arg2[%c0_1, %c0_2] : memref<8x16xf32, #tpu.memory_space<vmem>>, vector<8x16xf32>
    %4 = tpu.iota {dimensions = array<i32: 1>} : vector<8x128xi32>
    %5 = vector.extract_strided_slice %3 {offsets = [0, 0], sizes = [8, 1], strides = [1, 1]} : vector<8x16xf32> to vector<8x1xf32>
    %6 = vector.shape_cast %5 : vector<8x1xf32> to vector<8x1xf32>
    %7 = vector.broadcast %6 : vector<8x1xf32> to vector<8x128xf32>
    %8 = vector.extract_strided_slice %3 {offsets = [0, 8], sizes = [8, 1], strides = [1, 1]} : vector<8x16xf32> to vector<8x1xf32>
    %9 = vector.shape_cast %8 : vector<8x1xf32> to vector<8x1xf32>
    %10 = vector.broadcast %9 : vector<8x1xf32> to vector<8x128xf32>
    %11 = arith.mulf %1, %7 : vector<8x128xf32>
    %12 = arith.mulf %2, %10 : vector<8x128xf32>
    %13 = arith.subf %11, %12 : vector<8x128xf32>
    %14 = arith.mulf %1, %10 : vector<8x128xf32>
    %15 = arith.mulf %2, %7 : vector<8x128xf32>
    %16 = arith.addf %14, %15 : vector<8x128xf32>
    %c1_i32 = arith.constant 1 : i32
    %17 = tpu.dynamic_rotate %1 by %c1_i32 dim 1 : vector<8x128xf32>, i32 -> vector<8x128xf32>
    %c1_i32_3 = arith.constant 1 : i32
    %18 = tpu.dynamic_rotate %2 by %c1_i32_3 dim 1 : vector<8x128xf32>, i32 -> vector<8x128xf32>
    %19 = vector.extract_strided_slice %3 {offsets = [0, 1], sizes = [8, 1], strides = [1, 1]} : vector<8x16xf32> to vector<8x1xf32>
    %20 = vector.shape_cast %19 : vector<8x1xf32> to vector<8x1xf32>
    %21 = vector.broadcast %20 : vector<8x1xf32> to vector<8x128xf32>
    %22 = vector.extract_strided_slice %3 {offsets = [0, 9], sizes = [8, 1], strides = [1, 1]} : vector<8x16xf32> to vector<8x1xf32>
    %23 = vector.shape_cast %22 : vector<8x1xf32> to vector<8x1xf32>
    %24 = vector.broadcast %23 : vector<8x1xf32> to vector<8x128xf32>
    %c1_i32_4 = arith.constant 1 : i32
    %25 = vector.broadcast %c1_i32_4 : i32 to vector<8x128xi32>
    %26 = arith.cmpi slt, %4, %25 : vector<8x128xi32>
    %cst = arith.constant 0.000000e+00 : f32
    %27 = vector.broadcast %cst : f32 to vector<8x128xf32>
    %28 = arith.select %26, %27, %17 : vector<8x128xi1>, vector<8x128xf32>
    %c1_i32_5 = arith.constant 1 : i32
    %29 = vector.broadcast %c1_i32_5 : i32 to vector<8x128xi32>
    %30 = arith.cmpi slt, %4, %29 : vector<8x128xi32>
    %cst_6 = arith.constant 0.000000e+00 : f32
    %31 = vector.broadcast %cst_6 : f32 to vector<8x128xf32>
    %32 = arith.select %30, %31, %18 : vector<8x128xi1>, vector<8x128xf32>
    %33 = arith.mulf %28, %21 : vector<8x128xf32>
    %34 = arith.addf %13, %33 : vector<8x128xf32>
    %35 = arith.mulf %32, %24 : vector<8x128xf32>
    %36 = arith.subf %34, %35 : vector<8x128xf32>
    %37 = arith.mulf %28, %24 : vector<8x128xf32>
    %38 = arith.addf %16, %37 : vector<8x128xf32>
    %39 = arith.mulf %32, %21 : vector<8x128xf32>
    %40 = arith.addf %38, %39 : vector<8x128xf32>
    %c2_i32 = arith.constant 2 : i32
    %41 = tpu.dynamic_rotate %1 by %c2_i32 dim 1 : vector<8x128xf32>, i32 -> vector<8x128xf32>
    %c2_i32_7 = arith.constant 2 : i32
    %42 = tpu.dynamic_rotate %2 by %c2_i32_7 dim 1 : vector<8x128xf32>, i32 -> vector<8x128xf32>
    %43 = vector.extract_strided_slice %3 {offsets = [0, 2], sizes = [8, 1], strides = [1, 1]} : vector<8x16xf32> to vector<8x1xf32>
    %44 = vector.shape_cast %43 : vector<8x1xf32> to vector<8x1xf32>
    %45 = vector.broadcast %44 : vector<8x1xf32> to vector<8x128xf32>
    %46 = vector.extract_strided_slice %3 {offsets = [0, 10], sizes = [8, 1], strides = [1, 1]} : vector<8x16xf32> to vector<8x1xf32>
    %47 = vector.shape_cast %46 : vector<8x1xf32> to vector<8x1xf32>
    %48 = vector.broadcast %47 : vector<8x1xf32> to vector<8x128xf32>
    %c2_i32_8 = arith.constant 2 : i32
    %49 = vector.broadcast %c2_i32_8 : i32 to vector<8x128xi32>
    %50 = arith.cmpi slt, %4, %49 : vector<8x128xi32>
    %cst_9 = arith.constant 0.000000e+00 : f32
    %51 = vector.broadcast %cst_9 : f32 to vector<8x128xf32>
    %52 = arith.select %50, %51, %41 : vector<8x128xi1>, vector<8x128xf32>
    %c2_i32_10 = arith.constant 2 : i32
    %53 = vector.broadcast %c2_i32_10 : i32 to vector<8x128xi32>
    %54 = arith.cmpi slt, %4, %53 : vector<8x128xi32>
    %cst_11 = arith.constant 0.000000e+00 : f32
    %55 = vector.broadcast %cst_11 : f32 to vector<8x128xf32>
    %56 = arith.select %54, %55, %42 : vector<8x128xi1>, vector<8x128xf32>
    %57 = arith.mulf %52, %45 : vector<8x128xf32>
    %58 = arith.addf %36, %57 : vector<8x128xf32>
    %59 = arith.mulf %56, %48 : vector<8x128xf32>
    %60 = arith.subf %58, %59 : vector<8x128xf32>
    %61 = arith.mulf %52, %48 : vector<8x128xf32>
    %62 = arith.addf %40, %61 : vector<8x128xf32>
    %63 = arith.mulf %56, %45 : vector<8x128xf32>
    %64 = arith.addf %62, %63 : vector<8x128xf32>
    %c3_i32 = arith.constant 3 : i32
    %65 = tpu.dynamic_rotate %1 by %c3_i32 dim 1 : vector<8x128xf32>, i32 -> vector<8x128xf32>
    %c3_i32_12 = arith.constant 3 : i32
    %66 = tpu.dynamic_rotate %2 by %c3_i32_12 dim 1 : vector<8x128xf32>, i32 -> vector<8x128xf32>
    %67 = vector.extract_strided_slice %3 {offsets = [0, 3], sizes = [8, 1], strides = [1, 1]} : vector<8x16xf32> to vector<8x1xf32>
    %68 = vector.shape_cast %67 : vector<8x1xf32> to vector<8x1xf32>
    %69 = vector.broadcast %68 : vector<8x1xf32> to vector<8x128xf32>
    %70 = vector.extract_strided_slice %3 {offsets = [0, 11], sizes = [8, 1], strides = [1, 1]} : vector<8x16xf32> to vector<8x1xf32>
    %71 = vector.shape_cast %70 : vector<8x1xf32> to vector<8x1xf32>
    %72 = vector.broadcast %71 : vector<8x1xf32> to vector<8x128xf32>
    %c3_i32_13 = arith.constant 3 : i32
    %73 = vector.broadcast %c3_i32_13 : i32 to vector<8x128xi32>
    %74 = arith.cmpi slt, %4, %73 : vector<8x128xi32>
    %cst_14 = arith.constant 0.000000e+00 : f32
    %75 = vector.broadcast %cst_14 : f32 to vector<8x128xf32>
    %76 = arith.select %74, %75, %65 : vector<8x128xi1>, vector<8x128xf32>
    %c3_i32_15 = arith.constant 3 : i32
    %77 = vector.broadcast %c3_i32_15 : i32 to vector<8x128xi32>
    %78 = arith.cmpi slt, %4, %77 : vector<8x128xi32>
    %cst_16 = arith.constant 0.000000e+00 : f32
    %79 = vector.broadcast %cst_16 : f32 to vector<8x128xf32>
    %80 = arith.select %78, %79, %66 : vector<8x128xi1>, vector<8x128xf32>
    %81 = arith.mulf %76, %69 : vector<8x128xf32>
    %82 = arith.addf %60, %81 : vector<8x128xf32>
    %83 = arith.mulf %80, %72 : vector<8x128xf32>
    %84 = arith.subf %82, %83 : vector<8x128xf32>
    %85 = arith.mulf %76, %72 : vector<8x128xf32>
    %86 = arith.addf %64, %85 : vector<8x128xf32>
    %87 = arith.mulf %80, %69 : vector<8x128xf32>
    %88 = arith.addf %86, %87 : vector<8x128xf32>
    %c4_i32 = arith.constant 4 : i32
    %89 = tpu.dynamic_rotate %1 by %c4_i32 dim 1 : vector<8x128xf32>, i32 -> vector<8x128xf32>
    %c4_i32_17 = arith.constant 4 : i32
    %90 = tpu.dynamic_rotate %2 by %c4_i32_17 dim 1 : vector<8x128xf32>, i32 -> vector<8x128xf32>
    %91 = vector.extract_strided_slice %3 {offsets = [0, 4], sizes = [8, 1], strides = [1, 1]} : vector<8x16xf32> to vector<8x1xf32>
    %92 = vector.shape_cast %91 : vector<8x1xf32> to vector<8x1xf32>
    %93 = vector.broadcast %92 : vector<8x1xf32> to vector<8x128xf32>
    %94 = vector.extract_strided_slice %3 {offsets = [0, 12], sizes = [8, 1], strides = [1, 1]} : vector<8x16xf32> to vector<8x1xf32>
    %95 = vector.shape_cast %94 : vector<8x1xf32> to vector<8x1xf32>
    %96 = vector.broadcast %95 : vector<8x1xf32> to vector<8x128xf32>
    %c4_i32_18 = arith.constant 4 : i32
    %97 = vector.broadcast %c4_i32_18 : i32 to vector<8x128xi32>
    %98 = arith.cmpi slt, %4, %97 : vector<8x128xi32>
    %cst_19 = arith.constant 0.000000e+00 : f32
    %99 = vector.broadcast %cst_19 : f32 to vector<8x128xf32>
    %100 = arith.select %98, %99, %89 : vector<8x128xi1>, vector<8x128xf32>
    %c4_i32_20 = arith.constant 4 : i32
    %101 = vector.broadcast %c4_i32_20 : i32 to vector<8x128xi32>
    %102 = arith.cmpi slt, %4, %101 : vector<8x128xi32>
    %cst_21 = arith.constant 0.000000e+00 : f32
    %103 = vector.broadcast %cst_21 : f32 to vector<8x128xf32>
    %104 = arith.select %102, %103, %90 : vector<8x128xi1>, vector<8x128xf32>
    %105 = arith.mulf %100, %93 : vector<8x128xf32>
    %106 = arith.addf %84, %105 : vector<8x128xf32>
    %107 = arith.mulf %104, %96 : vector<8x128xf32>
    %108 = arith.subf %106, %107 : vector<8x128xf32>
    %109 = arith.mulf %100, %96 : vector<8x128xf32>
    %110 = arith.addf %88, %109 : vector<8x128xf32>
    %111 = arith.mulf %104, %93 : vector<8x128xf32>
    %112 = arith.addf %110, %111 : vector<8x128xf32>
    %c5_i32 = arith.constant 5 : i32
    %113 = tpu.dynamic_rotate %1 by %c5_i32 dim 1 : vector<8x128xf32>, i32 -> vector<8x128xf32>
    %c5_i32_22 = arith.constant 5 : i32
    %114 = tpu.dynamic_rotate %2 by %c5_i32_22 dim 1 : vector<8x128xf32>, i32 -> vector<8x128xf32>
    %115 = vector.extract_strided_slice %3 {offsets = [0, 5], sizes = [8, 1], strides = [1, 1]} : vector<8x16xf32> to vector<8x1xf32>
    %116 = vector.shape_cast %115 : vector<8x1xf32> to vector<8x1xf32>
    %117 = vector.broadcast %116 : vector<8x1xf32> to vector<8x128xf32>
    %118 = vector.extract_strided_slice %3 {offsets = [0, 13], sizes = [8, 1], strides = [1, 1]} : vector<8x16xf32> to vector<8x1xf32>
    %119 = vector.shape_cast %118 : vector<8x1xf32> to vector<8x1xf32>
    %120 = vector.broadcast %119 : vector<8x1xf32> to vector<8x128xf32>
    %c5_i32_23 = arith.constant 5 : i32
    %121 = vector.broadcast %c5_i32_23 : i32 to vector<8x128xi32>
    %122 = arith.cmpi slt, %4, %121 : vector<8x128xi32>
    %cst_24 = arith.constant 0.000000e+00 : f32
    %123 = vector.broadcast %cst_24 : f32 to vector<8x128xf32>
    %124 = arith.select %122, %123, %113 : vector<8x128xi1>, vector<8x128xf32>
    %c5_i32_25 = arith.constant 5 : i32
    %125 = vector.broadcast %c5_i32_25 : i32 to vector<8x128xi32>
    %126 = arith.cmpi slt, %4, %125 : vector<8x128xi32>
    %cst_26 = arith.constant 0.000000e+00 : f32
    %127 = vector.broadcast %cst_26 : f32 to vector<8x128xf32>
    %128 = arith.select %126, %127, %114 : vector<8x128xi1>, vector<8x128xf32>
    %129 = arith.mulf %124, %117 : vector<8x128xf32>
    %130 = arith.addf %108, %129 : vector<8x128xf32>
    %131 = arith.mulf %128, %120 : vector<8x128xf32>
    %132 = arith.subf %130, %131 : vector<8x128xf32>
    %133 = arith.mulf %124, %120 : vector<8x128xf32>
    %134 = arith.addf %112, %133 : vector<8x128xf32>
    %135 = arith.mulf %128, %117 : vector<8x128xf32>
    %136 = arith.addf %134, %135 : vector<8x128xf32>
    %c6_i32 = arith.constant 6 : i32
    %137 = tpu.dynamic_rotate %1 by %c6_i32 dim 1 : vector<8x128xf32>, i32 -> vector<8x128xf32>
    %c6_i32_27 = arith.constant 6 : i32
    %138 = tpu.dynamic_rotate %2 by %c6_i32_27 dim 1 : vector<8x128xf32>, i32 -> vector<8x128xf32>
    %139 = vector.extract_strided_slice %3 {offsets = [0, 6], sizes = [8, 1], strides = [1, 1]} : vector<8x16xf32> to vector<8x1xf32>
    %140 = vector.shape_cast %139 : vector<8x1xf32> to vector<8x1xf32>
    %141 = vector.broadcast %140 : vector<8x1xf32> to vector<8x128xf32>
    %142 = vector.extract_strided_slice %3 {offsets = [0, 14], sizes = [8, 1], strides = [1, 1]} : vector<8x16xf32> to vector<8x1xf32>
    %143 = vector.shape_cast %142 : vector<8x1xf32> to vector<8x1xf32>
    %144 = vector.broadcast %143 : vector<8x1xf32> to vector<8x128xf32>
    %c6_i32_28 = arith.constant 6 : i32
    %145 = vector.broadcast %c6_i32_28 : i32 to vector<8x128xi32>
    %146 = arith.cmpi slt, %4, %145 : vector<8x128xi32>
    %cst_29 = arith.constant 0.000000e+00 : f32
    %147 = vector.broadcast %cst_29 : f32 to vector<8x128xf32>
    %148 = arith.select %146, %147, %137 : vector<8x128xi1>, vector<8x128xf32>
    %c6_i32_30 = arith.constant 6 : i32
    %149 = vector.broadcast %c6_i32_30 : i32 to vector<8x128xi32>
    %150 = arith.cmpi slt, %4, %149 : vector<8x128xi32>
    %cst_31 = arith.constant 0.000000e+00 : f32
    %151 = vector.broadcast %cst_31 : f32 to vector<8x128xf32>
    %152 = arith.select %150, %151, %138 : vector<8x128xi1>, vector<8x128xf32>
    %153 = arith.mulf %148, %141 : vector<8x128xf32>
    %154 = arith.addf %132, %153 : vector<8x128xf32>
    %155 = arith.mulf %152, %144 : vector<8x128xf32>
    %156 = arith.subf %154, %155 : vector<8x128xf32>
    %157 = arith.mulf %148, %144 : vector<8x128xf32>
    %158 = arith.addf %136, %157 : vector<8x128xf32>
    %159 = arith.mulf %152, %141 : vector<8x128xf32>
    %160 = arith.addf %158, %159 : vector<8x128xf32>
    %c7_i32 = arith.constant 7 : i32
    %161 = tpu.dynamic_rotate %1 by %c7_i32 dim 1 : vector<8x128xf32>, i32 -> vector<8x128xf32>
    %c7_i32_32 = arith.constant 7 : i32
    %162 = tpu.dynamic_rotate %2 by %c7_i32_32 dim 1 : vector<8x128xf32>, i32 -> vector<8x128xf32>
    %163 = vector.extract_strided_slice %3 {offsets = [0, 7], sizes = [8, 1], strides = [1, 1]} : vector<8x16xf32> to vector<8x1xf32>
    %164 = vector.shape_cast %163 : vector<8x1xf32> to vector<8x1xf32>
    %165 = vector.broadcast %164 : vector<8x1xf32> to vector<8x128xf32>
    %166 = vector.extract_strided_slice %3 {offsets = [0, 15], sizes = [8, 1], strides = [1, 1]} : vector<8x16xf32> to vector<8x1xf32>
    %167 = vector.shape_cast %166 : vector<8x1xf32> to vector<8x1xf32>
    %168 = vector.broadcast %167 : vector<8x1xf32> to vector<8x128xf32>
    %c7_i32_33 = arith.constant 7 : i32
    %169 = vector.broadcast %c7_i32_33 : i32 to vector<8x128xi32>
    %170 = arith.cmpi slt, %4, %169 : vector<8x128xi32>
    %cst_34 = arith.constant 0.000000e+00 : f32
    %171 = vector.broadcast %cst_34 : f32 to vector<8x128xf32>
    %172 = arith.select %170, %171, %161 : vector<8x128xi1>, vector<8x128xf32>
    %c7_i32_35 = arith.constant 7 : i32
    %173 = vector.broadcast %c7_i32_35 : i32 to vector<8x128xi32>
    %174 = arith.cmpi slt, %4, %173 : vector<8x128xi32>
    %cst_36 = arith.constant 0.000000e+00 : f32
    %175 = vector.broadcast %cst_36 : f32 to vector<8x128xf32>
    %176 = arith.select %174, %175, %162 : vector<8x128xi1>, vector<8x128xf32>
    %177 = arith.mulf %172, %165 : vector<8x128xf32>
    %178 = arith.addf %156, %177 : vector<8x128xf32>
    %179 = arith.mulf %176, %168 : vector<8x128xf32>
    %180 = arith.subf %178, %179 : vector<8x128xf32>
    %181 = arith.mulf %172, %168 : vector<8x128xf32>
    %182 = arith.addf %160, %181 : vector<8x128xf32>
    %183 = arith.mulf %176, %165 : vector<8x128xf32>
    %184 = arith.addf %182, %183 : vector<8x128xf32>
    %c0_37 = arith.constant 0 : index
    %c0_38 = arith.constant 0 : index
    %185 = vector.load %arg4[%c0_37, %c0_38] : memref<8x256xf32, #tpu.memory_space<vmem>>, vector<8x128xf32>
    tpu.vector_store %arg4[%c0_37, %c0_38], %180 {strides = array<i32>} : memref<8x256xf32, #tpu.memory_space<vmem>>, vector<8x128xf32>,
    %c0_39 = arith.constant 0 : index
    %c128 = arith.constant 128 : index
    %186 = vector.load %arg4[%c0_39, %c128] : memref<8x256xf32, #tpu.memory_space<vmem>>, vector<8x128xf32>
    tpu.vector_store %arg4[%c0_39, %c128], %184 {strides = array<i32>} : memref<8x256xf32, #tpu.memory_space<vmem>>, vector<8x128xf32>,
    %c0_40 = arith.constant 0 : index
    %c0_41 = arith.constant 0 : index
    %187 = vector.load %arg3[%c0_40, %c0_41] : memref<16x128xf32, #tpu.memory_space<vmem>>, vector<16x128xf32>
    %cst_42 = arith.constant dense<0.000000e+00> : vector<8x128xf32>
    %188 = tpu.matmul %3, %187, %cst_42 {dimension_numbers = #tpu.dot_dimension_numbers<[1], [0], [0], [1], [0, 0, 1, 1], [], []>, precision = #tpu.contract_precision<fp32>} : vector<8x16xf32>, vector<16x128xf32>, vector<8x128xf32> -> vector<8x128xf32>
    %c0_43 = arith.constant 0 : index
    %c0_44 = arith.constant 0 : index
    %189 = vector.load %arg5[%c0_43, %c0_44] : memref<8x128xf32, #tpu.memory_space<vmem>>, vector<8x128xf32>
    tpu.vector_store %arg5[%c0_43, %c0_44], %188 {strides = array<i32>} : memref<8x128xf32, #tpu.memory_space<vmem>>, vector<8x128xf32>,
    return
  }
  func.func @transform_0(%arg0: i32) -> (i32, i32) {
    %c0_i32 = arith.constant 0 : i32
    %c0_i32_0 = arith.constant 0 : i32
    return %arg0, %c0_i32 : i32, i32
  }
  func.func @transform_1(%arg0: i32) -> (i32, i32) {
    %c0_i32 = arith.constant 0 : i32
    %c0_i32_0 = arith.constant 0 : i32
    return %arg0, %c0_i32 : i32, i32
  }
  func.func @transform_2(%arg0: i32) -> (i32, i32) {
    %c0_i32 = arith.constant 0 : i32
    %c0_i32_0 = arith.constant 0 : i32
    %c0_i32_1 = arith.constant 0 : i32
    return %c0_i32, %c0_i32_0 : i32, i32
  }
  func.func @transform_3(%arg0: i32) -> (i32, i32) {
    %c0_i32 = arith.constant 0 : i32
    %c0_i32_0 = arith.constant 0 : i32
    return %arg0, %c0_i32 : i32, i32
  }
  func.func @transform_4(%arg0: i32) -> (i32, i32) {
    %c0_i32 = arith.constant 0 : i32
    %c0_i32_0 = arith.constant 0 : i32
    return %arg0, %c0_i32 : i32, i32
  }
}

</mosaic_0001>

<llo_original>
// kernel: tpu_custom_call.1
$region0: #{tpu_custom_call.1}
  #allocation0 [shape = 'u32[]', space=smem, size = 0x4, offset = 0x4, fixed_abs, tag = 'smem constant byte address 0x4 - core index']
  #allocation1 [shape = 'u32[72,128]{1,0:T(1,128)}', space=vmem, size = 0x9000, scoped, tag = 'internal scratch']
  %s0 = inlined_call_operand.hbm [shape: f32[8,256], index: 0, kind: input, shape index: {}]
  %s1 = inlined_call_operand.hbm [shape: f32[8,16], index: 1, kind: input, shape index: {}]
  %s2 = inlined_call_operand.hbm [shape: f32[16,128], index: 2, kind: input, shape index: {}]
  %s3 = inlined_call_operand.hbm [shape: f32[8,256], index: 3, kind: output, shape index: {0}]
  %s4 = inlined_call_operand.hbm [shape: f32[8,128], index: 4, kind: output, shape index: {1}]
  %5 = xla_tuple %s3, %s4
  %s6 = sld [smem:[#allocation0]]
  $region42: #{tpu_custom_call.1} parent=0
    _
  %s8 = ssub.s32 1, %s6
  %s9 = scalar_select 0, %s8, %s6
  $region1: #{tpu_custom_call.1} parent=0
    #allocation2 [shape = 'u8[8192]{0}', space=vmem, size = 0x2000, scoped, tag = 'input window, operand 0, single buffered']
    #allocation3 [shape = 's32[1]{0}', space=sflag, size = 0x4, scoped, tag = 'scoped memory for tpu_custom_call.1']
    #allocation4 [shape = 's32[1]{0}', space=sflag, size = 0x4, scoped, tag = 'scoped memory for tpu_custom_call.1']
    #allocation5 [shape = 'u8[4096]{0}', space=vmem, size = 0x1000, scoped, tag = 'input window, operand 1, single buffered']
    #allocation6 [shape = 's32[1]{0}', space=sflag, size = 0x4, scoped, tag = 'scoped memory for tpu_custom_call.1']
    #allocation7 [shape = 'u8[8192]{0}', space=vmem, size = 0x2000, scoped, tag = 'input window, operand 2, single buffered']
    #allocation8 [shape = 'u8[8192]{0}', space=vmem, size = 0x2000, scoped, tag = 'output window, operand 0, single buffered']
    #allocation9 [shape = 'u8[4096]{0}', space=vmem, size = 0x1000, scoped, tag = 'output window, operand 1, single buffered']
    #allocation10 [shape = 's32[1]{0}', space=sflag, size = 0x4, scoped, tag = 'scoped memory for tpu_custom_call.1']
    %10 = vsyncpa [#allocation3], 0
    %11 = vsyncpa [#allocation6], 0
    %12 = vsyncpa [#allocation4], 0
    %13 = vsyncpa [#allocation10], 0
    // Predicated region
    $region2: #{tpu_custom_call.1} parent=1 // pred_check
      _
    $region3: #{tpu_custom_call.1} parent=1 // pred_check_branch
      %15 = sbr.rel (0) target = $region5
    $region4: #{tpu_custom_call.1} parent=1 // pred_region
      %17 = vsyncadd [#allocation3], 0
      %s19 = sshll.u32 %s0, 4
      %s20 = int_to_ptr.hbm [resolvable:$true] %s19
      %s21 = sshll.u32 [#allocation2], 4
      %s22 = int_to_ptr.vmem [resolvable:$true] %s21
      %24 = dma.hbm_to_vmem [thread:$0]  %s20, 256, %s22, [#allocation3]
    $region5: #{tpu_custom_call.1} parent=1 // pred_fallthru
      _
    // Predicated region
    $region6: #{tpu_custom_call.1} parent=1 // pred_check
      _
    $region7: #{tpu_custom_call.1} parent=1 // pred_check_branch
      %26 = sbr.rel (0) target = $region9
    $region8: #{tpu_custom_call.1} parent=1 // pred_region
      %28 = vsyncadd [#allocation6], 0
      %s30 = sshll.u32 %s1, 4
      %s31 = int_to_ptr.hbm [resolvable:$true] %s30
      %s32 = sshll.u32 [#allocation5], 4
      %s33 = int_to_ptr.vmem [resolvable:$true] %s32
      %35 = dma.hbm_to_vmem [thread:$0]  %s31, 128, %s33, [#allocation6]
    $region9: #{tpu_custom_call.1} parent=1 // pred_fallthru
      _
    // Predicated region
    $region10: #{tpu_custom_call.1} parent=1 // pred_check
      _
    $region11: #{tpu_custom_call.1} parent=1 // pred_check_branch
      %37 = sbr.rel (0) target = $region13
    $region12: #{tpu_custom_call.1} parent=1 // pred_region
      %39 = vsyncadd [#allocation6], 0
      %s40 = sshll.u32 %s2, 4
      %s41 = int_to_ptr.hbm [resolvable:$true] %s40
      %s42 = sshll.u32 [#allocation7], 4
      %s43 = int_to_ptr.vmem [resolvable:$true] %s42
      %48 = dma.hbm_to_vmem [thread:$0]  %s41, 256, %s43, [#allocation6], 128, 128, 8
    $region13: #{tpu_custom_call.1} parent=1 // pred_fallthru
      _
    // Predicated region
    $region14: #{tpu_custom_call.1} parent=1 // pred_check
      _
    $region15: #{tpu_custom_call.1} parent=1 // pred_check_branch
      %50 = sbr.rel (0) target = $region17
    $region16: #{tpu_custom_call.1} parent=1 // pred_region
      %52 = dma.done [#allocation3], 256
    $region17: #{tpu_custom_call.1} parent=1 // pred_fallthru
      _
    // Predicated region
    $region18: #{tpu_custom_call.1} parent=1 // pred_check
      _
    $region19: #{tpu_custom_call.1} parent=1 // pred_check_branch
      %54 = sbr.rel (0) target = $region21
    $region20: #{tpu_custom_call.1} parent=1 // pred_region
      %56 = dma.done [#allocation6], 128
    $region21: #{tpu_custom_call.1} parent=1 // pred_fallthru
      _
    // Predicated region
    $region22: #{tpu_custom_call.1} parent=1 // pred_check
      _
    $region23: #{tpu_custom_call.1} parent=1 // pred_check_branch
      %58 = sbr.rel (0) target = $region25
    $region24: #{tpu_custom_call.1} parent=1 // pred_region
      %60 = dma.done [#allocation6], 256
    $region25: #{tpu_custom_call.1} parent=1 // pred_fallthru
      _
    %v61 = vld [vmem:[#allocation2] sm:$0xff]
    %v62 = vld [vmem:[#allocation2 + $0x8] sm:$0xff]
    %v63 = vld [vmem:[#allocation5] sm:$0xff]
    %v64 = vlaneseq
    %v65 = vand.u32 %v64, 127
    %67 = vset.pattern.permute.xlu0 0
    %68 = vperm.xlu0 %67, %v63
    %v69 = vpop.permute.xlu0 %68
    %71 = vset.pattern.permute.xlu0 8
    %72 = vperm.xlu0 %71, %v63
    %v73 = vpop.permute.xlu0 %72
    %v75 = vmul.f32 %v61, %v69
    %v76 = vmul.f32 %v62, %v73
    %v77 = vsub.f32 %v75, %v76
    %v78 = vmul.f32 %v61, %v73
    %v79 = vmul.f32 %v62, %v69
    %v80 = vadd.f32 %v78, %v79
    %81 = vrot.lane.b32.xlu0 %v61, 1
    %v82 = vpop.permute.xlu0 %81
    %83 = vrot.lane.b32.xlu0 %v62, 1
    %v84 = vpop.permute.xlu0 %83
    %85 = vset.pattern.permute.xlu0 1
    %86 = vperm.xlu0 %85, %v63
    %v87 = vpop.permute.xlu0 %86
    %89 = vset.pattern.permute.xlu0 9
    %90 = vperm.xlu0 %89, %v63
    %v91 = vpop.permute.xlu0 %90
    %vm93 = vcmp.lt.s32.totalorder %v65, 1
    %v94 = vsel %vm93, 0.0, %v82
    %v95 = vsel %vm93, 0.0, %v84
    %v96 = vmul.f32 %v94, %v87
    %v97 = vadd.f32 %v77, %v96
    %v98 = vmul.f32 %v95, %v91
    %v99 = vsub.f32 %v97, %v98
    %v100 = vmul.f32 %v94, %v91
    %v101 = vadd.f32 %v80, %v100
    %v102 = vmul.f32 %v95, %v87
    %v103 = vadd.f32 %v101, %v102
    %104 = vrot.lane.b32.xlu0 %v61, 2
    %v105 = vpop.permute.xlu0 %104
    %106 = vrot.lane.b32.xlu0 %v62, 2
    %v107 = vpop.permute.xlu0 %106
    %108 = vset.pattern.permute.xlu0 2
    %109 = vperm.xlu0 %108, %v63
    %v110 = vpop.permute.xlu0 %109
    %112 = vset.pattern.permute.xlu0 10
    %113 = vperm.xlu0 %112, %v63
    %v114 = vpop.permute.xlu0 %113
    %vm116 = vcmp.lt.s32.totalorder %v65, 2
    %v117 = vsel %vm116, 0.0, %v105
    %v118 = vsel %vm116, 0.0, %v107
    %v119 = vmul.f32 %v117, %v110
    %v120 = vadd.f32 %v99, %v119
    %v121 = vmul.f32 %v118, %v114
    %v122 = vsub.f32 %v120, %v121
    %v123 = vmul.f32 %v117, %v114
    %v124 = vadd.f32 %v103, %v123
    %v125 = vmul.f32 %v118, %v110
    %v126 = vadd.f32 %v124, %v125
    %127 = vrot.lane.b32.xlu0 %v61, 3
    %v128 = vpop.permute.xlu0 %127
    %129 = vrot.lane.b32.xlu0 %v62, 3
    %v130 = vpop.permute.xlu0 %129
    %131 = vset.pattern.permute.xlu0 3
    %132 = vperm.xlu0 %131, %v63
    %v133 = vpop.permute.xlu0 %132
    %135 = vset.pattern.permute.xlu0 11
    %136 = vperm.xlu0 %135, %v63
    %v137 = vpop.permute.xlu0 %136
    %vm139 = vcmp.lt.s32.totalorder %v65, 3
    %v140 = vsel %vm139, 0.0, %v128
    %v141 = vsel %vm139, 0.0, %v130
    %v142 = vmul.f32 %v140, %v133
    %v143 = vadd.f32 %v122, %v142
    %v144 = vmul.f32 %v141, %v137
    %v145 = vsub.f32 %v143, %v144
    %v146 = vmul.f32 %v140, %v137
    %v147 = vadd.f32 %v126, %v146
    %v148 = vmul.f32 %v141, %v133
    %v149 = vadd.f32 %v147, %v148
    %150 = vrot.lane.b32.xlu0 %v61, 4
    %v151 = vpop.permute.xlu0 %150
    %152 = vrot.lane.b32.xlu0 %v62, 4
    %v153 = vpop.permute.xlu0 %152
    %154 = vset.pattern.permute.xlu0 4
    %155 = vperm.xlu0 %154, %v63
    %v156 = vpop.permute.xlu0 %155
    %158 = vset.pattern.permute.xlu0 12
    %159 = vperm.xlu0 %158, %v63
    %v160 = vpop.permute.xlu0 %159
    %vm162 = vcmp.lt.s32.totalorder %v65, 4
    %v163 = vsel %vm162, 0.0, %v151
    %v164 = vsel %vm162, 0.0, %v153
    %v165 = vmul.f32 %v163, %v156
    %v166 = vadd.f32 %v145, %v165
    %v167 = vmul.f32 %v164, %v160
    %v168 = vsub.f32 %v166, %v167
    %v169 = vmul.f32 %v163, %v160
    %v170 = vadd.f32 %v149, %v169
    %v171 = vmul.f32 %v164, %v156
    %v172 = vadd.f32 %v170, %v171
    %173 = vrot.lane.b32.xlu0 %v61, 5
    %v174 = vpop.permute.xlu0 %173
    %175 = vrot.lane.b32.xlu0 %v62, 5
    %v176 = vpop.permute.xlu0 %175
    %177 = vset.pattern.permute.xlu0 5
    %178 = vperm.xlu0 %177, %v63
    %v179 = vpop.permute.xlu0 %178
    %181 = vset.pattern.permute.xlu0 13
    %182 = vperm.xlu0 %181, %v63
    %v183 = vpop.permute.xlu0 %182
    %vm185 = vcmp.lt.s32.totalorder %v65, 5
    %v186 = vsel %vm185, 0.0, %v174
    %v187 = vsel %vm185, 0.0, %v176
    %v188 = vmul.f32 %v186, %v179
    %v189 = vadd.f32 %v168, %v188
    %v190 = vmul.f32 %v187, %v183
    %v191 = vsub.f32 %v189, %v190
    %v192 = vmul.f32 %v186, %v183
    %v193 = vadd.f32 %v172, %v192
    %v194 = vmul.f32 %v187, %v179
    %v195 = vadd.f32 %v193, %v194
    %196 = vrot.lane.b32.xlu0 %v61, 6
    %v197 = vpop.permute.xlu0 %196
    %198 = vrot.lane.b32.xlu0 %v62, 6
    %v199 = vpop.permute.xlu0 %198
    %200 = vset.pattern.permute.xlu0 6
    %201 = vperm.xlu0 %200, %v63
    %v202 = vpop.permute.xlu0 %201
    %204 = vset.pattern.permute.xlu0 14
    %205 = vperm.xlu0 %204, %v63
    %v206 = vpop.permute.xlu0 %205
    %vm208 = vcmp.lt.s32.totalorder %v65, 6
    %v209 = vsel %vm208, 0.0, %v197
    %v210 = vsel %vm208, 0.0, %v199
    %v211 = vmul.f32 %v209, %v202
    %v212 = vadd.f32 %v191, %v211
    %v213 = vmul.f32 %v210, %v206
    %v214 = vsub.f32 %v212, %v213
    %v215 = vmul.f32 %v209, %v206
    %v216 = vadd.f32 %v195, %v215
    %v217 = vmul.f32 %v210, %v202
    %v218 = vadd.f32 %v216, %v217
    %219 = vrot.lane.b32.xlu0 %v61, 7
    %v220 = vpop.permute.xlu0 %219
    %221 = vrot.lane.b32.xlu0 %v62, 7
    %v222 = vpop.permute.xlu0 %221
    %223 = vset.pattern.permute.xlu0 7
    %224 = vperm.xlu0 %223, %v63
    %v225 = vpop.permute.xlu0 %224
    %227 = vset.pattern.permute.xlu0 15
    %228 = vperm.xlu0 %227, %v63
    %v229 = vpop.permute.xlu0 %228
    %vm231 = vcmp.lt.s32.totalorder %v65, 7
    %v232 = vsel %vm231, 0.0, %v220
    %v233 = vsel %vm231, 0.0, %v222
    %v234 = vmul.f32 %v232, %v225
    %v235 = vadd.f32 %v214, %v234
    %v236 = vmul.f32 %v233, %v229
    %v237 = vsub.f32 %v235, %v236
    %v238 = vmul.f32 %v232, %v229
    %v239 = vadd.f32 %v218, %v238
    %v240 = vmul.f32 %v233, %v225
    %v241 = vadd.f32 %v239, %v240
    %242 = vst [vmem:[#allocation8] sm:$0xff] %v237
    %243 = vst [vmem:[#allocation8 + $0x8] sm:$0xff] %v241
    %v244 = vld [vmem:[#allocation7] sm:$0xff]
    %v245 = vld [vmem:[#allocation7 + $0x8] sm:$0xff]
    %vm246 = vcmask 130048
    %v247 = vsel %vm246, %v63, 0
    %249 = vmatpush.msra.mxu0 0.0
    %250 = vmatpush.msra.mxu0 0.0
    %251 = vmatpush.msra.mxu0 0.0
    %252 = vmatpush.msra.mxu0 0.0
    %253 = vmatpush.msra.mxu0 0.0
    %254 = vmatpush.msra.mxu0 0.0
    %255 = vmatpush.msra.mxu0 0.0
    %256 = vmatpush.msra.mxu0 0.0
    %257 = vmatpush.msra.mxu0 0.0
    %258 = vmatpush.msra.mxu0 0.0
    %259 = vmatpush.msra.mxu0 0.0
    %260 = vmatpush.msra.mxu0 0.0
    %261 = vmatpush.msra.mxu0 0.0
    %262 = vmatpush.msra.mxu0 0.0
    %v263 = vand.u32 %v245, 4294901760
    %264 = vmatpush.msra.mxu0 %v263
    %v265 = vand.u32 %v244, 4294901760
    %266 = vmatpush.msra.mxu0 %v265
    %v267 = vand.u32 %v247, 4294901760
    %v268 = vsub.f32 %v247, %v267
    %v269 = vand.u32 %v268, 4294901760
    %v270 = vsub.f32 %v268, %v269
    %v271 = vand.u32 %v270, 4294901760
    %272 = vmatmul.f32.gmra.mxu0 %v271
    %v273 = vpop.f32.mrf.mxu0
    %v274 = vadd.f32 0.0, %v273
    %275 = vdwg.mxu0
    %276 = vmatpush.msra.mxu0 0.0
    %277 = vmatpush.msra.mxu0 0.0
    %278 = vmatpush.msra.mxu0 0.0
    %279 = vmatpush.msra.mxu0 0.0
    %280 = vmatpush.msra.mxu0 0.0
    %281 = vmatpush.msra.mxu0 0.0
    %282 = vmatpush.msra.mxu0 0.0
    %283 = vmatpush.msra.mxu0 0.0
    %284 = vmatpush.msra.mxu0 0.0
    %285 = vmatpush.msra.mxu0 0.0
    %286 = vmatpush.msra.mxu0 0.0
    %287 = vmatpush.msra.mxu0 0.0
    %288 = vmatpush.msra.mxu0 0.0
    %289 = vmatpush.msra.mxu0 0.0
    %v290 = vand.u32 %v245, 4294901760
    %v291 = vsub.f32 %v245, %v290
    %v292 = vand.u32 %v291, 4294901760
    %v293 = vsub.f32 %v291, %v292
    %v294 = vand.u32 %v293, 4294901760
    %295 = vmatpush.msra.mxu0 %v294
    %v296 = vand.u32 %v244, 4294901760
    %v297 = vsub.f32 %v244, %v296
    %v298 = vand.u32 %v297, 4294901760
    %v299 = vsub.f32 %v297, %v298
    %v300 = vand.u32 %v299, 4294901760
    %301 = vmatpush.msra.mxu0 %v300
    %v302 = vand.u32 %v247, 4294901760
    %303 = vmatmul.f32.gmra.mxu0 %v302
    %v304 = vpop.f32.mrf.mxu0
    %v305 = vadd.f32 %v274, %v304
    %306 = vdwg.mxu0
    %307 = vmatpush.msra.mxu0 0.0
    %308 = vmatpush.msra.mxu0 0.0
    %309 = vmatpush.msra.mxu0 0.0
    %310 = vmatpush.msra.mxu0 0.0
    %311 = vmatpush.msra.mxu0 0.0
    %312 = vmatpush.msra.mxu0 0.0
    %313 = vmatpush.msra.mxu0 0.0
    %314 = vmatpush.msra.mxu0 0.0
    %315 = vmatpush.msra.mxu0 0.0
    %316 = vmatpush.msra.mxu0 0.0
    %317 = vmatpush.msra.mxu0 0.0
    %318 = vmatpush.msra.mxu0 0.0
    %319 = vmatpush.msra.mxu0 0.0
    %320 = vmatpush.msra.mxu0 0.0
    %v321 = vand.u32 %v245, 4294901760
    %v322 = vsub.f32 %v245, %v321
    %323 = vmatpush.msra.mxu0 %v322
    %v324 = vand.u32 %v244, 4294901760
    %v325 = vsub.f32 %v244, %v324
    %326 = vmatpush.msra.mxu0 %v325
    %v327 = vand.u32 %v247, 4294901760
    %v328 = vsub.f32 %v247, %v327
    %329 = vmatmul.f32.gmra.mxu0 %v328
    %v330 = vpop.f32.mrf.mxu0
    %v331 = vadd.f32 %v305, %v330
    %332 = vdwg.mxu0
    %333 = vmatpush.msra.mxu0 0.0
    %334 = vmatpush.msra.mxu0 0.0
    %335 = vmatpush.msra.mxu0 0.0
    %336 = vmatpush.msra.mxu0 0.0
    %337 = vmatpush.msra.mxu0 0.0
    %338 = vmatpush.msra.mxu0 0.0
    %339 = vmatpush.msra.mxu0 0.0
    %340 = vmatpush.msra.mxu0 0.0
    %341 = vmatpush.msra.mxu0 0.0
    %342 = vmatpush.msra.mxu0 0.0
    %343 = vmatpush.msra.mxu0 0.0
    %344 = vmatpush.msra.mxu0 0.0
    %345 = vmatpush.msra.mxu0 0.0
    %346 = vmatpush.msra.mxu0 0.0
    %v347 = vand.u32 %v245, 4294901760
    %348 = vmatpush.msra.mxu0 %v347
    %v349 = vand.u32 %v244, 4294901760
    %350 = vmatpush.msra.mxu0 %v349
    %v351 = vand.u32 %v247, 4294901760
    %v352 = vsub.f32 %v247, %v351
    %v353 = vand.u32 %v352, 4294901760
    %354 = vmatmul.f32.gmra.mxu0 %v353
    %v355 = vpop.f32.mrf.mxu0
    %v356 = vadd.f32 %v331, %v355
    %357 = vdwg.mxu0
    %358 = vmatpush.msra.mxu0 0.0
    %359 = vmatpush.msra.mxu0 0.0
    %360 = vmatpush.msra.mxu0 0.0
    %361 = vmatpush.msra.mxu0 0.0
    %362 = vmatpush.msra.mxu0 0.0
    %363 = vmatpush.msra.mxu0 0.0
    %364 = vmatpush.msra.mxu0 0.0
    %365 = vmatpush.msra.mxu0 0.0
    %366 = vmatpush.msra.mxu0 0.0
    %367 = vmatpush.msra.mxu0 0.0
    %368 = vmatpush.msra.mxu0 0.0
    %369 = vmatpush.msra.mxu0 0.0
    %370 = vmatpush.msra.mxu0 0.0
    %371 = vmatpush.msra.mxu0 0.0
    %v372 = vand.u32 %v245, 4294901760
    %v373 = vsub.f32 %v245, %v372
    %v374 = vand.u32 %v373, 4294901760
    %375 = vmatpush.msra.mxu0 %v374
    %v376 = vand.u32 %v244, 4294901760
    %v377 = vsub.f32 %v244, %v376
    %v378 = vand.u32 %v377, 4294901760
    %379 = vmatpush.msra.mxu0 %v378
    %v380 = vand.u32 %v247, 4294901760
    %381 = vmatmul.f32.gmra.mxu0 %v380
    %v382 = vpop.f32.mrf.mxu0
    %v383 = vadd.f32 %v356, %v382
    %384 = vdwg.mxu0
    %385 = vmatpush.msra.mxu0 0.0
    %386 = vmatpush.msra.mxu0 0.0
    %387 = vmatpush.msra.mxu0 0.0
    %388 = vmatpush.msra.mxu0 0.0
    %389 = vmatpush.msra.mxu0 0.0
    %390 = vmatpush.msra.mxu0 0.0
    %391 = vmatpush.msra.mxu0 0.0
    %392 = vmatpush.msra.mxu0 0.0
    %393 = vmatpush.msra.mxu0 0.0
    %394 = vmatpush.msra.mxu0 0.0
    %395 = vmatpush.msra.mxu0 0.0
    %396 = vmatpush.msra.mxu0 0.0
    %397 = vmatpush.msra.mxu0 0.0
    %398 = vmatpush.msra.mxu0 0.0
    %v399 = vand.u32 %v245, 4294901760
    %400 = vmatpush.msra.mxu0 %v399
    %v401 = vand.u32 %v244, 4294901760
    %402 = vmatpush.msra.mxu0 %v401
    %v403 = vand.u32 %v247, 4294901760
    %404 = vmatmul.f32.gmra.mxu0 %v403
    %v405 = vpop.f32.mrf.mxu0
    %v406 = vadd.f32 %v383, %v405
    %407 = vdwg.mxu0
    %408 = vst [vmem:[#allocation9] sm:$0xff] %v406
    // Predicated region
    $region26: #{tpu_custom_call.1} parent=1 // pred_check
      _
    $region27: #{tpu_custom_call.1} parent=1 // pred_check_branch
      %410 = sbr.rel (0) target = $region29
    $region28: #{tpu_custom_call.1} parent=1 // pred_region
      %412 = vsyncadd [#allocation4], 0
      %s414 = sshll.u32 [#allocation8], 4
      %s415 = int_to_ptr.vmem [resolvable:$true] %s414
      %s416 = sshll.u32 %s3, 4
      %s417 = int_to_ptr.hbm [resolvable:$true] %s416
      %419 = dma.vmem_to_hbm [thread:$0]  %s415, 256, %s417, [#allocation4]
    $region29: #{tpu_custom_call.1} parent=1 // pred_fallthru
      _
    // Predicated region
    $region30: #{tpu_custom_call.1} parent=1 // pred_check
      _
    $region31: #{tpu_custom_call.1} parent=1 // pred_check_branch
      %421 = sbr.rel (0) target = $region33
    $region32: #{tpu_custom_call.1} parent=1 // pred_region
      %423 = vsyncadd [#allocation10], 0
      %s425 = sshll.u32 [#allocation9], 4
      %s426 = int_to_ptr.vmem [resolvable:$true] %s425
      %s427 = sshll.u32 %s4, 4
      %s428 = int_to_ptr.hbm [resolvable:$true] %s427
      %430 = dma.vmem_to_hbm [thread:$0]  %s426, 128, %s428, [#allocation10]
    $region33: #{tpu_custom_call.1} parent=1 // pred_fallthru
      _
    // Predicated region
    $region34: #{tpu_custom_call.1} parent=1 // pred_check
      _
    $region35: #{tpu_custom_call.1} parent=1 // pred_check_branch
      %432 = sbr.rel (0) target = $region37
    $region36: #{tpu_custom_call.1} parent=1 // pred_region
      %434 = dma.done [#allocation4], 256
    $region37: #{tpu_custom_call.1} parent=1 // pred_fallthru
      _
    // Predicated region
    $region38: #{tpu_custom_call.1} parent=1 // pred_check
      _
    $region39: #{tpu_custom_call.1} parent=1 // pred_check_branch
      %436 = sbr.rel (0) target = $region41
    $region40: #{tpu_custom_call.1} parent=1 // pred_region
      %438 = dma.done [#allocation10], 128
    $region41: #{tpu_custom_call.1} parent=1 // pred_fallthru
      _
    %439 = vsyncpa [#allocation3], 1
    %440 = vsyncpa [#allocation6], 1
    %441 = vsyncpa [#allocation4], 1
    %442 = vsyncpa [#allocation10], 1

</llo_original>
